<compile_context>
chip_gen: v7x
topology: tpu7x:2x2x1
jax: 0.10.0
libtpu: 0.0.40
codegen_flags: <defaults>
</compile_context>

<pallas_src>
import functools
import itertools
import math

import jax
import jax.numpy as jnp
from jax.experimental import pallas as pl
from jax.experimental.pallas import tpu as pltpu

SQRT2 = math.sqrt(2.0)
BLUR_TAPS = (1.0 / 8.0, 3.0 / 8.0, 3.0 / 8.0, 1.0 / 8.0)  # (1,3,3,1) normalized


def _round_up(x, m):
    return (x + m - 1) // m * m


# ---------------------------------------------------------------------------
# Pallas kernel: tiled GEMM (bf16 MXU, f32 accumulator) + bias + lrelu + gain
# ---------------------------------------------------------------------------
def _mm_bias_act_kernel(x_ref, w_ref, b_ref, o_ref, acc_ref, *, act, slope, gain):
    k = pl.program_id(2)

    @pl.when(k == 0)
    def _():
        acc_ref[...] = jnp.zeros_like(acc_ref)

    acc_ref[...] += jnp.dot(x_ref[...], w_ref[...],
                            preferred_element_type=jnp.float32)

    @pl.when(k == pl.num_programs(2) - 1)
    def _():
        acc = acc_ref[...] + b_ref[...]
        if act == "lrelu":
            acc = jnp.where(acc >= 0.0, acc, acc * slope)
        if gain != 1.0:
            acc = acc * gain
        o_ref[...] = acc.astype(o_ref.dtype)


def matmul_bias_act(x, w, b, act="none", slope=0.2, gain=1.0):
    """o = act(x @ w + b) * gain.   x:(M,K)  w:(K,N)  b:(N,).  f32 output."""
    M, K = x.shape
    Kw, N = w.shape
    assert K == Kw

    # --- tile selection -----------------------------------------------------
    if M >= 256 and M % 256 == 0:
        TM = 256
    elif M >= 128:
        TM = 128
    else:
        TM = _round_up(M, 8)
    Mpad = _round_up(M, TM)

    Npad = _round_up(N, 128)
    TN = 256 if (Npad % 256 == 0 and Npad >= 256) else 128

    if K <= 2048:
        TK, Kpad = K, K
    else:
        TK = 1024
        Kpad = _round_up(K, TK)

    # --- operand prep (bf16 feeds the MXU; epilogue stays f32) --------------
    xb = x.astype(jnp.bfloat16)
    wb = w.astype(jnp.bfloat16)
    if Mpad != M or Kpad != K:
        xb = jnp.pad(xb, ((0, Mpad - M), (0, Kpad - K)))
    if Kpad != K or Npad != N:
        wb = jnp.pad(wb, ((0, Kpad - K), (0, Npad - N)))
    b2 = b.astype(jnp.float32).reshape(1, N)
    if Npad != N:
        b2 = jnp.pad(b2, ((0, 0), (0, Npad - N)))

    grid = (Mpad // TM, Npad // TN, Kpad // TK)
    out = pl.pallas_call(
        functools.partial(_mm_bias_act_kernel, act=act, slope=slope, gain=gain),
        grid=grid,
        in_specs=[
            pl.BlockSpec((TM, TK), lambda i, j, k: (i, k)),
            pl.BlockSpec((TK, TN), lambda i, j, k: (k, j)),
            pl.BlockSpec((1, TN), lambda i, j, k: (0, j)),
        ],
        out_specs=pl.BlockSpec((TM, TN), lambda i, j, k: (i, j)),
        out_shape=jax.ShapeDtypeStruct((Mpad, Npad), jnp.float32),
        scratch_shapes=[pltpu.VMEM((TM, TN), jnp.float32)],
        compiler_params=pltpu.CompilerParams(
            dimension_semantics=("parallel", "parallel", "arbitrary"),
            vmem_limit_bytes=32 * 1024 * 1024,
        ),
    )(xb, wb, b2)
    if Mpad != M or Npad != N:
        out = out[:M, :N]
    return out


# ---------------------------------------------------------------------------
# Pallas kernel: separable 4-tap blur (VPU shifted adds), NHWC, per-batch grid
# ---------------------------------------------------------------------------
def _blur_sep_kernel(x_ref, o_ref, *, taps):
    x = x_ref[...].astype(jnp.float32)            # (1, Hp, Wp, C)
    Ho = o_ref.shape[1]
    Wo = o_ref.shape[2]
    # horizontal pass
    t = taps[0] * x[:, :, 0:Wo, :]
    for j in range(1, len(taps)):
        t = t + taps[j] * x[:, :, j:j + Wo, :]
    # vertical pass
    y = taps[0] * t[:, 0:Ho, :, :]
    for j in range(1, len(taps)):
        y = y + taps[j] * t[:, j:j + Ho, :, :]
    o_ref[...] = y.astype(o_ref.dtype)


def blur_nhwc(x, pad):
    """upfirdn2d(up=1, down=1) with separable (1,3,3,1)/8 kernel.  x: NHWC."""
    # TODO(synk): for very large spatial sizes, tile H/W with halos instead of
    # one (Hp, Wp, C) block per batch element.
    B, H, W, C = x.shape
    p0, p1 = pad
    xp = jnp.pad(x, ((0, 0), (p0, p1), (p0, p1), (0, 0))).astype(jnp.float32)
    Hp, Wp = H + p0 + p1, W + p0 + p1
    Ho, Wo = Hp - 4 + 1, Wp - 4 + 1
    return pl.pallas_call(
        functools.partial(_blur_sep_kernel, taps=BLUR_TAPS),
        grid=(B,),
        in_specs=[pl.BlockSpec((1, Hp, Wp, C), lambda b: (b, 0, 0, 0))],
        out_specs=pl.BlockSpec((1, Ho, Wo, C), lambda b: (b, 0, 0, 0)),
        out_shape=jax.ShapeDtypeStruct((B, Ho, Wo, C), jnp.float32),
        compiler_params=pltpu.CompilerParams(dimension_semantics=("parallel",)),
    )(xp)


# ---------------------------------------------------------------------------
# Pallas kernel: channel-last group normalization (batch / instance norm)
# ---------------------------------------------------------------------------
def _chan_norm_kernel(x_ref, g_ref, b_ref, o_ref, *, eps, act, slope):
    x = x_ref[...].astype(jnp.float32)            # (1, R, C)
    mean = jnp.mean(x, axis=1, keepdims=True)
    var = jnp.mean(jnp.square(x - mean), axis=1, keepdims=True)
    y = (x - mean) * jax.lax.rsqrt(var + eps)
    y = y * g_ref[...] + b_ref[...]               # (1, 1, C) broadcast
    if act == "lrelu":
        y = jnp.where(y >= 0.0, y, y * slope)
    o_ref[...] = y.astype(o_ref.dtype)


def channel_norm_act(x3, gamma, beta, eps=1e-5, act="lrelu", slope=0.2):
    """x3: (G, R, C); normalize each channel over R per group g; affine; lrelu.

    G=1, R=B*H*W  -> BatchNorm2d (batch statistics, training mode)
    G=B, R=H*W    -> InstanceNorm2d
    """
    # TODO(synk): for very large R (huge spatial instance norm), switch to a
    # two-phase tiled reduction (stats pass + apply pass) to stay VMEM-safe.
    G, R, C = x3.shape
    g3 = gamma.reshape(1, 1, C).astype(jnp.float32)
    b3 = beta.reshape(1, 1, C).astype(jnp.float32)
    return pl.pallas_call(
        functools.partial(_chan_norm_kernel, eps=eps, act=act, slope=slope),
        grid=(G,),
        in_specs=[
            pl.BlockSpec((1, R, C), lambda g: (g, 0, 0)),
            pl.BlockSpec((1, 1, C), lambda g: (0, 0, 0)),
            pl.BlockSpec((1, 1, C), lambda g: (0, 0, 0)),
        ],
        out_specs=pl.BlockSpec((1, R, C), lambda g: (g, 0, 0)),
        out_shape=jax.ShapeDtypeStruct((G, R, C), jnp.float32),
        compiler_params=pltpu.CompilerParams(dimension_semantics=("parallel",)),
    )(x3.astype(jnp.float32), g3, b3)


# ---------------------------------------------------------------------------
# Pallas kernel: PixelNorm (per-row lane reduction), row-tiled
# ---------------------------------------------------------------------------
def _pixel_norm_kernel(x_ref, o_ref, *, eps):
    x = x_ref[...].astype(jnp.float32)
    ms = jnp.mean(x * x, axis=-1, keepdims=True)
    o_ref[...] = (x * jax.lax.rsqrt(ms + eps)).astype(o_ref.dtype)


def pixel_norm(x, eps=1e-8):
    R, L = x.shape
    TR = min(256, _round_up(R, 8))
    Rpad = _round_up(R, TR)
    xp = x.astype(jnp.float32)
    if Rpad != R:
        xp = jnp.pad(xp, ((0, Rpad - R), (0, 0)))
    out = pl.pallas_call(
        functools.partial(_pixel_norm_kernel, eps=eps),
        grid=(Rpad // TR,),
        in_specs=[pl.BlockSpec((TR, L), lambda i: (i, 0))],
        out_specs=pl.BlockSpec((TR, L), lambda i: (i, 0)),
        out_shape=jax.ShapeDtypeStruct((Rpad, L), jnp.float32),
        compiler_params=pltpu.CompilerParams(dimension_semantics=("parallel",)),
    )(xp)
    return out[:R]


# ---------------------------------------------------------------------------
# Conv glue (NHWC im2col in bf16) -> Pallas GEMM
# ---------------------------------------------------------------------------
def _im2col_nhwc(x, kh, kw, stride, pad):
    B, H, W, C = x.shape
    xp = jnp.pad(x, ((0, 0), (pad, pad), (pad, pad), (0, 0)))
    Hp, Wp = H + 2 * pad, W + 2 * pad
    Ho = (Hp - kh) // stride + 1
    Wo = (Wp - kw) // stride + 1
    cols = []
    for di in range(kh):
        for dj in range(kw):
            cols.append(xp[:, di:di + stride * Ho:stride,
                           dj:dj + stride * Wo:stride, :])
    patches = jnp.stack(cols, axis=3)              # (B, Ho, Wo, kh*kw, C)
    return patches.reshape(B * Ho * Wo, kh * kw * C), Ho, Wo


def conv2d_gemm_nhwc(x, weight, bias, stride, padding, act="none", gain=1.0):
    """PyTorch-style cross-correlation Conv2d on NHWC via im2col + Pallas GEMM."""
    B, H, W, _ = x.shape
    Cout, Cin, kh, kw = weight.shape
    xb = x.astype(jnp.bfloat16)                    # halve im2col HBM traffic
    if kh == 1 and kw == 1 and padding == 0 and stride == 1:
        patches = xb.reshape(B * H * W, Cin)
        Ho, Wo = H, W
    else:
        patches, Ho, Wo = _im2col_nhwc(xb, kh, kw, stride, padding)
    # (Cout, Cin, kh, kw) -> (kh*kw*Cin, Cout) matching patch column order
    wmat = jnp.transpose(weight, (2, 3, 1, 0)).reshape(kh * kw * Cin, Cout)
    out = matmul_bias_act(patches, wmat, bias, act=act, gain=gain)
    return out.reshape(B, Ho, Wo, Cout)


# ---------------------------------------------------------------------------
# Layers (parameters + forward)
# ---------------------------------------------------------------------------
def equal_linear_params(key, in_dim, out_dim, lr_mul=1.0):
    w = jax.random.normal(key, (out_dim, in_dim), jnp.float32) / lr_mul
    return {"w": w, "b": jnp.zeros((out_dim,), jnp.float32),
            "scale": (1.0 / math.sqrt(in_dim)) * lr_mul, "lr_mul": lr_mul}


def equal_linear_fused_lrelu(x, p):
    w_eff = (p["w"] * p["scale"]).T
    b_eff = p["b"] * p["lr_mul"]
    return matmul_bias_act(x, w_eff, b_eff, act="lrelu", gain=SQRT2)


def conv_layer_params(key, in_ch, out_ch, kernel, downsample=False):
    w = jax.random.normal(key, (out_ch, in_ch, kernel, kernel), jnp.float32)
    p = {"w": w,
         "scale": 1.0 / math.sqrt(in_ch * kernel * kernel),
         "bias": jnp.zeros((out_ch,), jnp.float32),   # FusedLeakyReLU bias
         "kernel": kernel, "downsample": downsample}
    if downsample:
        pb = (4 - 2) + (kernel - 1)                    # len(blur_kernel)=4, factor=2
        p["blur_pad"] = ((pb + 1) // 2, pb // 2)
    return p


def conv_layer(x, p):
    if p["downsample"]:
        x = blur_nhwc(x, p["blur_pad"])
        stride, padding = 2, 0
    else:
        stride, padding = 1, p["kernel"] // 2
    w_eff = p["w"] * p["scale"]
    # EqualConv2d(bias=False) + FusedLeakyReLU: lrelu(conv + b, 0.2) * sqrt(2)
    return conv2d_gemm_nhwc(x, w_eff, p["bias"], stride, padding,
                            act="lrelu", gain=SQRT2)


def conv_block_params(key, in_ch, out_ch, kernel=3, padding=1, stride=1, norm="batch"):
    kw_, kb_ = jax.random.split(key)
    fan_in = in_ch * kernel * kernel
    w = jax.random.normal(kw_, (out_ch, in_ch, kernel, kernel),
                          jnp.float32) / math.sqrt(fan_in)
    b = 0.01 * jax.random.normal(kb_, (out_ch,), jnp.float32)
    return {"w": w, "b": b,
            "gamma": jnp.ones((out_ch,), jnp.float32),
            "beta": jnp.zeros((out_ch,), jnp.float32),
            "stride": stride, "padding": padding, "norm": norm}


def conv_block(x, p):
    """ConvBlock: Conv2d(bias) -> {BatchNorm|InstanceNorm|None} -> LeakyReLU(0.2)."""
    if p["norm"] is None:
        return conv2d_gemm_nhwc(x, p["w"], p["b"], p["stride"], p["padding"],
                                act="lrelu", gain=1.0)
    y = conv2d_gemm_nhwc(x, p["w"], p["b"], p["stride"], p["padding"],
                         act="none", gain=1.0)
    B, H, W, C = y.shape
    if p["norm"] == "batch":
        y3 = y.reshape(1, B * H * W, C)           # reduce over N,H,W per channel
    else:                                         # instance: reduce over H,W per (n,c)
        y3 = y.reshape(B, H * W, C)
    out = channel_norm_act(y3, p["gamma"], p["beta"], eps=1e-5, act="lrelu")
    return out.reshape(B, H, W, C)


def expression_fusion_block_params(key, in_ch, style_dim, spatial, expression_dim):
    block_size = int(math.log(spatial, 2))
    n_same = max(0, 4 - block_size)
    n_keys = n_same + block_size + 4
    keys = iter(jax.random.split(key, n_keys))
    blocks = []
    out_ch = in_ch
    in_ch = in_ch + expression_dim
    for _ in range(n_same):
        blocks.append(conv_block_params(next(keys), in_ch, in_ch, kernel=3,
                                        padding=1, stride=1, norm="batch"))
    sp = spatial
    for _ in range(block_size):
        if out_ch != style_dim:
            out_ch = out_ch * 2
        sp = sp // 2
        norm = None if sp == 1 else "instance"
        blocks.append(conv_block_params(next(keys), in_ch, out_ch, kernel=3,
                                        padding=1, stride=2, norm=norm))
        in_ch = out_ch
    linears = []
    for i in range(4):
        ind = style_dim * 2 if i == 0 else style_dim
        linears.append(equal_linear_params(next(keys), ind, style_dim, lr_mul=0.01))
    return {"blocks": blocks, "linears": linears}


def expression_fusion_block(img_nhwc, exp, pre_style, p):
    B, H, W, _ = img_nhwc.shape
    e = jnp.broadcast_to(exp[:, None, None, :], (B, H, W, exp.shape[1]))
    x = jnp.concatenate([img_nhwc, e], axis=-1)
    for bp in p["blocks"]:
        x = conv_block(x, bp)
    x = x.reshape(B, -1)
    x = jnp.concatenate([x, pre_style], axis=1)
    for lp in p["linears"]:
        x = equal_linear_fused_lrelu(x, lp)
    return x


# ---------------------------------------------------------------------------
# StylizedExpressionEncoder
# ---------------------------------------------------------------------------
def stylized_expression_encoder_params(key, size, style_dim, n_mlp, expression_dim,
                                       channel_multiplier=2, narrow=1):
    channels = {4: int(512 * narrow), 8: int(512 * narrow), 16: int(512 * narrow),
                32: int(512 * narrow), 64: int(256 * channel_multiplier * narrow),
                128: int(128 * channel_multiplier * narrow),
                256: int(64 * channel_multiplier * narrow),
                512: int(32 * channel_multiplier * narrow),
                1024: int(16 * channel_multiplier * narrow)}
    log_size = int(math.log(size, 2))
    keys = iter(jax.random.split(key, 128))

    ecds = [conv_layer_params(next(keys), 3, channels[size], 1, downsample=False)]
    in_ch = channels[size]
    for i in range(log_size, 2, -1):
        out_ch = channels[2 ** (i - 1)]
        ecds.append(conv_layer_params(next(keys), in_ch, out_ch, 3, downsample=True))
        in_ch = out_ch

    final = equal_linear_params(next(keys), channels[4] * 4 * 4, style_dim, lr_mul=1.0)

    fusion = []
    for i in range(n_mlp):
        ind = style_dim + expression_dim if i == 0 else style_dim
        fusion.append(equal_linear_params(next(keys), ind, style_dim, lr_mul=0.01))

    fbs = []
    for i in range(3, log_size + 2):
        spatial = 2 ** (i - 1)
        fbs.append(expression_fusion_block_params(next(keys), channels[spatial],
                                                  style_dim, spatial, expression_dim))
    return {"ecds": ecds, "final": final, "fusion": fusion, "fbs": fbs,
            "log_size": log_size}


def stylized_expression_encoder_forward(params, inputs_nchw, expression):
    # interface is NCHW (PyTorch); compute in NHWC internally
    x = jnp.transpose(inputs_nchw, (0, 2, 3, 1))
    noise_nhwc = []
    for p in params["ecds"]:
        x = conv_layer(x, p)
        noise_nhwc.append(x)
    B = x.shape[0]
    flat = x.reshape(B, -1)
    noise_nhwc = noise_nhwc[::-1]

    outs = equal_linear_fused_lrelu(flat, params["final"])

    y = jnp.concatenate([outs, expression], axis=1)
    y = pixel_norm(y)
    for lp in params["fusion"]:
        y = equal_linear_fused_lrelu(y, lp)
    style = y

    styles = []
    for i, fbp in enumerate(params["fbs"]):
        style = expression_fusion_block(noise_nhwc[i], expression, style, fbp)
        styles.append(style)

    # noise maps are returned in PyTorch NCHW layout at the interface boundary
    noise_nchw = [jnp.transpose(n, (0, 3, 1, 2)) for n in noise_nhwc]
    noise_out = list(itertools.chain.from_iterable(
        itertools.repeat(n, 2) for n in noise_nchw))
    styles_rep = list(itertools.chain.from_iterable(
        itertools.repeat(s, 2) for s in styles))
    styles_out = jnp.stack(styles_rep, axis=1)
    return outs, noise_out, styles_out


if __name__ == "__main__":
    # Small but structure-consistent config: size=16 -> log_size=4, 3 encoder
    # stages (16->8->4), 3 fusion blocks; narrow=1/16 shrinks channels to 32.
    size, style_dim, n_mlp, expression_dim = 16, 32, 2, 16
    narrow = 1 / 16

    key = jax.random.PRNGKey(0)
    kp, kx, ke = jax.random.split(key, 3)
    params = stylized_expression_encoder_params(kp, size, style_dim, n_mlp,
                                                expression_dim,
                                                channel_multiplier=2, narrow=narrow)
    inputs = jax.random.normal(kx, (2, 3, size, size), jnp.float32)       # NCHW
    expression = jax.random.normal(ke, (2, expression_dim), jnp.float32)

    outs, noise, styles = stylized_expression_encoder_forward(params, inputs, expression)
    jax.block_until_ready(outs)
    for n in noise:
        jax.block_until_ready(n)
    jax.block_until_ready(styles)

    log_size = params["log_size"]
    assert outs.shape == (2, style_dim)
    assert len(noise) == 2 * (log_size - 1)
    assert noise[0].shape[1] == 32 and noise[0].shape[2] == 4   # NCHW, deepest first
    assert styles.shape == (2, 2 * (log_size - 1), style_dim)
    print("KERNEL_OK")
</pallas_src>

<mosaic_0001>
module attributes {stable_mosaic.version = 11 : i64} {
  func.func @_mm_bias_act_kernel(%arg0: i32, %arg1: i32, %arg2: i32, %arg3: memref<256x3xbf16, #tpu.memory_space<vmem>>, %arg4: memref<3x128xbf16, #tpu.memory_space<vmem>>, %arg5: memref<1x128xf32, #tpu.memory_space<vmem>>, %arg6: memref<256x128xf32, #tpu.memory_space<vmem>>, %arg7: memref<256x128xf32, #tpu.memory_space<vmem>>) attributes {dimension_semantics = [#tpu.dimension_semantics<parallel>, #tpu.dimension_semantics<parallel>, #tpu.dimension_semantics<arbitrary>], iteration_bounds = array<i64: 2, 1, 1>, scalar_prefetch = 0 : i64, scratch_operands = 1 : i64, tpu.core_type = #tpu.core_type<tc>, window_params = [{transform_indices = @transform_0, window_bounds = array<i64: 256, 3>}, {transform_indices = @transform_1, window_bounds = array<i64: 3, 128>}, {transform_indices = @transform_2, window_bounds = array<i64: 1, 128>}, {transform_indices = @transform_3, window_bounds = array<i64: 256, 128>}]} {
    %c0_i32 = arith.constant 0 : i32
    %0 = arith.cmpi eq, %arg2, %c0_i32 : i32
    %1 = arith.extui %0 : i1 to i32
    %c0_i32_0 = arith.constant 0 : i32
    %2 = arith.cmpi ne, %1, %c0_i32_0 : i32
    scf.if %2 {
      %cst_10 = arith.constant 0.000000e+00 : f32
      %12 = vector.broadcast %cst_10 : f32 to vector<256x128xf32>
      %c0_11 = arith.constant 0 : index
      %c0_12 = arith.constant 0 : index
      %13 = vector.load %arg7[%c0_11, %c0_12] : memref<256x128xf32, #tpu.memory_space<vmem>>, vector<256x128xf32>
      tpu.vector_store %arg7[%c0_11, %c0_12], %12 {strides = array<i32>} : memref<256x128xf32, #tpu.memory_space<vmem>>, vector<256x128xf32>,
    } else {
    }
    %c0 = arith.constant 0 : index
    %c0_1 = arith.constant 0 : index
    %3 = vector.load %arg7[%c0, %c0_1] : memref<256x128xf32, #tpu.memory_space<vmem>>, vector<256x128xf32>
    %c0_2 = arith.constant 0 : index
    %c0_3 = arith.constant 0 : index
    %4 = vector.load %arg3[%c0_2, %c0_3] : memref<256x3xbf16, #tpu.memory_space<vmem>>, vector<256x3xbf16>
    %c0_4 = arith.constant 0 : index
    %c0_5 = arith.constant 0 : index
    %5 = vector.load %arg4[%c0_4, %c0_5] : memref<3x128xbf16, #tpu.memory_space<vmem>>, vector<3x128xbf16>
    %cst = arith.constant dense<0.000000e+00> : vector<256x128xf32>
    %6 = tpu.matmul %4, %5, %cst {dimension_numbers = #tpu.dot_dimension_numbers<[1], [0], [0], [1], [0, 0, 1, 1], [], []>} : vector<256x3xbf16>, vector<3x128xbf16>, vector<256x128xf32> -> vector<256x128xf32>
    %7 = arith.addf %3, %6 : vector<256x128xf32>
    %c0_6 = arith.constant 0 : index
    %c0_7 = arith.constant 0 : index
    %8 = vector.load %arg7[%c0_6, %c0_7] : memref<256x128xf32, #tpu.memory_space<vmem>>, vector<256x128xf32>
    tpu.vector_store %arg7[%c0_6, %c0_7], %7 {strides = array<i32>} : memref<256x128xf32, #tpu.memory_space<vmem>>, vector<256x128xf32>,
    %c0_i32_8 = arith.constant 0 : i32
    %9 = arith.cmpi eq, %arg2, %c0_i32_8 : i32
    %10 = arith.extui %9 : i1 to i32
    %c0_i32_9 = arith.constant 0 : i32
    %11 = arith.cmpi ne, %10, %c0_i32_9 : i32
    scf.if %11 {
      %c0_10 = arith.constant 0 : index
      %c0_11 = arith.constant 0 : index
      %12 = vector.load %arg7[%c0_10, %c0_11] : memref<256x128xf32, #tpu.memory_space<vmem>>, vector<256x128xf32>
      %c0_12 = arith.constant 0 : index
      %c0_13 = arith.constant 0 : index
      %13 = vector.load %arg5[%c0_12, %c0_13] : memref<1x128xf32, #tpu.memory_space<vmem>>, vector<1x128xf32>
      %14 = vector.broadcast %13 : vector<1x128xf32> to vector<256x128xf32>
      %15 = arith.addf %12, %14 : vector<256x128xf32>
      %cst_14 = arith.constant 0.000000e+00 : f32
      %16 = vector.broadcast %cst_14 : f32 to vector<256x128xf32>
      %17 = arith.cmpf oge, %15, %16 : vector<256x128xf32>
      %cst_15 = arith.constant 2.000000e-01 : f32
      %18 = vector.broadcast %cst_15 : f32 to vector<256x128xf32>
      %19 = arith.mulf %15, %18 : vector<256x128xf32>
      %20 = arith.select %17, %15, %19 : vector<256x128xi1>, vector<256x128xf32>
      %cst_16 = arith.constant 1.41421354 : f32
      %21 = vector.broadcast %cst_16 : f32 to vector<256x128xf32>
      %22 = arith.mulf %20, %21 : vector<256x128xf32>
      %c0_17 = arith.constant 0 : index
      %c0_18 = arith.constant 0 : index
      %23 = vector.load %arg6[%c0_17, %c0_18] : memref<256x128xf32, #tpu.memory_space<vmem>>, vector<256x128xf32>
      tpu.vector_store %arg6[%c0_17, %c0_18], %22 {strides = array<i32>} : memref<256x128xf32, #tpu.memory_space<vmem>>, vector<256x128xf32>,
    } else {
    }
    return
  }
  func.func @transform_0(%arg0: i32, %arg1: i32, %arg2: i32) -> (i32, i32) {
    %c0_i32 = arith.constant 0 : i32
    return %arg0, %arg2 : i32, i32
  }
  func.func @transform_1(%arg0: i32, %arg1: i32, %arg2: i32) -> (i32, i32) {
    %c0_i32 = arith.constant 0 : i32
    return %arg2, %arg1 : i32, i32
  }
  func.func @transform_2(%arg0: i32, %arg1: i32, %arg2: i32) -> (i32, i32) {
    %c0_i32 = arith.constant 0 : i32
    %c0_i32_0 = arith.constant 0 : i32
    return %c0_i32, %arg1 : i32, i32
  }
  func.func @transform_3(%arg0: i32, %arg1: i32, %arg2: i32) -> (i32, i32) {
    %c0_i32 = arith.constant 0 : i32
    return %arg0, %arg1 : i32, i32
  }
}

</mosaic_0001>

<llo_original>
// kernel: tpu_custom_call.1
$region0: #{tpu_custom_call.1}
  #allocation0 [shape = 'u32[]', space=smem, size = 0x4, offset = 0x4, fixed_abs, tag = 'smem constant byte address 0x4 - core index']
  #allocation1 [shape = 'u32[144,128]{1,0:T(1,128)}', space=vmem, size = 0x12000, scoped, tag = 'internal scratch']
  #allocation2 [shape = 'f32[256,128]{1,0:T(8,128)}', space=vmem, size = 0x20000, scoped, tag = 'scratch operand']
  %s0 = inlined_call_operand.vmem [shape: bf16[512,3], index: 0, kind: input, shape index: {}]
  %s1 = inlined_call_operand.vmem [shape: bf16[3,128], index: 1, kind: input, shape index: {}]
  %s2 = inlined_call_operand.vmem [shape: f32[1,128], index: 2, kind: input, shape index: {}]
  %s3 = inlined_call_operand.hbm [shape: f32[512,128], index: 3, kind: output, shape index: {}]
  %s4 = sld [smem:[#allocation0]]
  $region53: #{tpu_custom_call.1} parent=0
    _
  %s6 = ssub.s32 1, %s4
  %s7 = scalar_select 0, %s6, %s4
  $region1: #{tpu_custom_call.1} parent=0
    #allocation3 [shape = 'u8[262144]{0}', space=vmem, size = 0x40000, scoped, tag = 'output window, operand 0']
    #allocation4 [shape = 's32[2]{0}', space=sflag, size = 0x8, scoped, tag = 'scoped memory for tpu_custom_call.1']
    %8 = vsyncpa [#allocation4], 0
    %s9 = scalar_lea.sflag [#allocation4], 1
    %10 = vsyncpa %s9, 0
    loop: start=0, step=1, limit=4
    $region2: #{tpu_custom_call.1} parent=1 // loop_pre_header
      _
    $region3: #{tpu_custom_call.1} parent=1 // loop_header
      %s12 = sphi 0, %s16
      %p13 = scmp.ge.s32.totalorder %s12, 4
      %s19 = sphi 0, %s38
      %s20 = sphi 0, %s34
      %s21 = sphi 0, %s30
      %s22 = sphi 0, %s19
      %s23 = sphi 0, %s20
      %s24 = sphi 0, %s21
      %s25 = sphi 0, %s22
      %s26 = sphi 0, %s23
      %s27 = sphi 0, %s24
      %s43 = sphi 0, %s45
      %s46 = sphi 0, %s43
      %s47 = sphi 0, %s46
      %s63 = sphi 0, %s47
      %s71 = sphi 0, %s73
      %s74 = sphi 0, %s71
      %s75 = sphi 0, %s74
      %s91 = sphi 0, %s75
      %s97 = sphi 0, %s99
      %s100 = sphi 0, %s97
      %s101 = sphi 0, %s100
      %s117 = sphi 0, %s101
      %s125 = sphi 0, %s127
      %s128 = sphi 0, %s125
      %s129 = sphi 0, %s128
      %s145 = sphi 0, %s129
    $region4: #{tpu_custom_call.1} parent=1 // loop_header_branch
      %15 = sbr.rel (%p13) target = $region8
    $region5: #{tpu_custom_call.1} parent=1 // loop_body
      %s17 = ssub.s32 %s12, 1
      %s18 = ssub.s32 %s12, 2
      %s28 = sadd.s32 1, %s21
      %p29 = scmp.ge.s32.totalorder %s28, 1
      %s30 = scalar_select %p29, 0, %s28
      %s31 = sadd.s32 1, %s20
      %s32 = scalar_select %p29, %s31, %s20
      %p33 = scmp.ge.s32.totalorder %s32, 1
      %s34 = scalar_select %p33, 0, %s32
      %s35 = sadd.s32 1, %s19
      %s36 = scalar_select %p33, %s35, %s19
      %p37 = scmp.ge.s32.totalorder %s36, 2
      %s38 = scalar_select %p37, 0, %s36
      %s39 = ssub.s32 %s19, %s38
      %s40 = ssub.s32 %s21, %s30
      %s41 = sor.u32 %s39, %s40
      %p42 = scmp.eq.s32.totalorder %s41, 0
      %s44 = sadd.s32 %s43, 1
      %s45 = scalar_select %p42, %s43, %s44
      %p48 = pneg %p42
      %p49 = scmp.eq.s32.totalorder %s12, 1
      %p50 = por %p48, %p49
      %p51 = scmp.ne.s32.totalorder %s43, %s46
      %p52 = scmp.eq.s32.totalorder %s12, 0
      %p53 = por %p51, %p52
      %p54 = scmp.ne.s32.totalorder %s43, %s46
      %p55 = scmp.eq.s32.totalorder %s17, 1
      %p56 = por %p54, %p55
      %p57 = scmp.ne.s32.totalorder %s46, %s47
      %p58 = scmp.eq.s32.totalorder %s17, 0
      %p59 = por %p57, %p58
      %p60 = scmp.ne.s32.totalorder %s46, %s47
      %p61 = scmp.eq.s32.totalorder %s18, 1
      %p62 = por %p60, %p61
      %p64 = scmp.ne.s32.totalorder %s47, %s63
      %p65 = scmp.eq.s32.totalorder %s18, 0
      %p66 = por %p64, %p65
      %s67 = ssub.s32 %s21, %s30
      %s68 = ssub.s32 %s20, %s34
      %s69 = sor.u32 %s67, %s68
      %p70 = scmp.eq.s32.totalorder %s69, 0
      %s72 = sadd.s32 %s71, 1
      %s73 = scalar_select %p70, %s71, %s72
      %p76 = pneg %p70
      %p77 = scmp.eq.s32.totalorder %s12, 1
      %p78 = por %p76, %p77
      %p79 = scmp.ne.s32.totalorder %s71, %s74
      %p80 = scmp.eq.s32.totalorder %s12, 0
      %p81 = por %p79, %p80
      %p82 = scmp.ne.s32.totalorder %s71, %s74
      %p83 = scmp.eq.s32.totalorder %s17, 1
      %p84 = por %p82, %p83
      %p85 = scmp.ne.s32.totalorder %s74, %s75
      %p86 = scmp.eq.s32.totalorder %s17, 0
      %p87 = por %p85, %p86
      %p88 = scmp.ne.s32.totalorder %s74, %s75
      %p89 = scmp.eq.s32.totalorder %s18, 1
      %p90 = por %p88, %p89
      %p92 = scmp.ne.s32.totalorder %s75, %s91
      %p93 = scmp.eq.s32.totalorder %s18, 0
      %p94 = por %p92, %p93
      %s95 = ssub.s32 %s20, %s34
      %p96 = scmp.eq.s32.totalorder %s95, 0
      %s98 = sadd.s32 %s97, 1
      %s99 = scalar_select %p96, %s97, %s98
      %p102 = pneg %p96
      %p103 = scmp.eq.s32.totalorder %s12, 1
      %p104 = por %p102, %p103
      %p105 = scmp.ne.s32.totalorder %s97, %s100
      %p106 = scmp.eq.s32.totalorder %s12, 0
      %p107 = por %p105, %p106
      %p108 = scmp.ne.s32.totalorder %s97, %s100
      %p109 = scmp.eq.s32.totalorder %s17, 1
      %p110 = por %p108, %p109
      %p111 = scmp.ne.s32.totalorder %s100, %s101
      %p112 = scmp.eq.s32.totalorder %s17, 0
      %p113 = por %p111, %p112
      %p114 = scmp.ne.s32.totalorder %s100, %s101
      %p115 = scmp.eq.s32.totalorder %s18, 1
      %p116 = por %p114, %p115
      %p118 = scmp.ne.s32.totalorder %s101, %s117
      %p119 = scmp.eq.s32.totalorder %s18, 0
      %p120 = por %p118, %p119
      %s121 = ssub.s32 %s19, %s38
      %s122 = ssub.s32 %s20, %s34
      %s123 = sor.u32 %s121, %s122
      %p124 = scmp.eq.s32.totalorder %s123, 0
      %s126 = sadd.s32 %s125, 1
      %s127 = scalar_select %p124, %s125, %s126
      %p130 = pneg %p124
      %p131 = scmp.eq.s32.totalorder %s12, 1
      %p132 = por %p130, %p131
      %p133 = scmp.ne.s32.totalorder %s125, %s128
      %p134 = scmp.eq.s32.totalorder %s12, 0
      %p135 = por %p133, %p134
      %p136 = scmp.ne.s32.totalorder %s125, %s128
      %p137 = scmp.eq.s32.totalorder %s17, 1
      %p138 = por %p136, %p137
      %p139 = scmp.ne.s32.totalorder %s128, %s129
      %p140 = scmp.eq.s32.totalorder %s17, 0
      %p141 = por %p139, %p140
      %p142 = scmp.ne.s32.totalorder %s128, %s129
      %p143 = scmp.eq.s32.totalorder %s18, 1
      %p144 = por %p142, %p143
      %p146 = scmp.ne.s32.totalorder %s129, %s145
      %p147 = scmp.eq.s32.totalorder %s18, 0
      %p148 = por %p146, %p147
      %p149 = scmp.le.s32.totalorder 1, %s12
      %p150 = scmp.lt.s32.totalorder %s12, 3
      %p151 = pnand %p149, %p150
      %p152 = pneg %p151
      // Predicated region
      $region9: #{tpu_custom_call.1} parent=5 // pred_check
        _
      $region10: #{tpu_custom_call.1} parent=5 // pred_check_branch
        %154 = sbr.rel (%p151) target = $region12
      $region11: #{tpu_custom_call.1} parent=5 // pred_region
        %s155 = ssub.s32 %s12, 1
        // Predicated region
        $region13: #{tpu_custom_call.1} parent=11 // pred_check
          %p156 = pneg %p87
        $region14: #{tpu_custom_call.1} parent=11 // pred_check_branch
          %158 = sbr.rel (%p156) target = $region16
        $region15: #{tpu_custom_call.1} parent=11 // pred_region
          %p159 = scmp.lt.s32.totalorder %s24, 0
          %s160 = scalar_select %p159, %s24, 0
          %p161 = scmp.lt.s32.totalorder %s23, 0
          %s162 = scalar_select %p161, %s23, 0
          %s163 = sadd.s32 %s162, %s160
          %s164 = smul.addr %s163, 2
          %s165 = scalar_lea.vmem %s1, %s164
        $region16: #{tpu_custom_call.1} parent=11 // pred_fallthru
          _
        // Predicated region
        $region17: #{tpu_custom_call.1} parent=11 // pred_check
          %p166 = pneg %p113
        $region18: #{tpu_custom_call.1} parent=11 // pred_check_branch
          %168 = sbr.rel (%p166) target = $region20
        $region19: #{tpu_custom_call.1} parent=11 // pred_region
          %p169 = scmp.lt.s32.totalorder %s23, 0
          %s170 = scalar_select %p169, %s23, 0
          %s171 = scalar_lea.vmem %s2, %s170
        $region20: #{tpu_custom_call.1} parent=11 // pred_fallthru
          _
      $region12: #{tpu_custom_call.1} parent=5 // pred_fallthru
        _
      %p172 = scmp.lt.s32.totalorder %s12, 2
      // Predicated region
      $region21: #{tpu_custom_call.1} parent=5 // pred_check
        %p173 = pneg %p172
      $region22: #{tpu_custom_call.1} parent=5 // pred_check_branch
        %175 = sbr.rel (%p173) target = $region24
      $region23: #{tpu_custom_call.1} parent=5 // pred_region
        // Predicated region
        $region25: #{tpu_custom_call.1} parent=23 // pred_check
          %p176 = pneg %p53
        $region26: #{tpu_custom_call.1} parent=23 // pred_check_branch
          %178 = sbr.rel (%p176) target = $region28
        $region27: #{tpu_custom_call.1} parent=23 // pred_region
          %s179 = smul.u32 32, %s19
          %p180 = scmp.lt.s32.totalorder %s179, 63
          %s181 = scalar_select %p180, %s179, 63
          %p182 = scmp.lt.s32.totalorder %s21, 0
          %s183 = scalar_select %p182, %s21, 0
          %s184 = sadd.s32 %s183, %s181
          %s185 = smul.addr %s184, 4
          %s186 = scalar_lea.vmem %s0, %s185
          %s187 = smul.u32 32, %s19
        $region28: #{tpu_custom_call.1} parent=23 // pred_fallthru
          _
      $region24: #{tpu_custom_call.1} parent=5 // pred_fallthru
        _
      %p188 = scmp.le.s32.totalorder 1, %s12
      %p189 = scmp.lt.s32.totalorder %s12, 3
      %p190 = pnand %p188, %p189
      %p191 = pneg %p190
      // Predicated region
      $region29: #{tpu_custom_call.1} parent=5 // pred_check
        _
      $region30: #{tpu_custom_call.1} parent=5 // pred_check_branch
        %193 = sbr.rel (%p190) target = $region32
      $region31: #{tpu_custom_call.1} parent=5 // pred_region
        %s194 = ssub.s32 %s12, 1
        %s195 = smul.u32 32, %s22
        %p196 = scmp.lt.s32.totalorder %s195, 63
        %s197 = scalar_select %p196, %s195, 63
        %p198 = scmp.lt.s32.totalorder %s24, 0
        %s199 = scalar_select %p198, %s24, 0
        %s200 = sadd.s32 %s199, %s197
        %s201 = smul.addr %s200, 4
        %s202 = scalar_lea.vmem %s0, %s201
        %p203 = pneg %p59
        %p204 = pneg %p56
        %p205 = scmp.lt.s32.totalorder %s24, 0
        %s206 = scalar_select %p205, %s24, 0
        %p207 = scmp.lt.s32.totalorder %s23, 0
        %s208 = scalar_select %p207, %s23, 0
        %s209 = sadd.s32 %s208, %s206
        %s210 = smul.addr %s209, 2
        %s211 = scalar_lea.vmem %s1, %s210
        %p212 = pneg %p87
        %p213 = pneg %p84
        %p214 = scmp.lt.s32.totalorder %s23, 0
        %s215 = scalar_select %p214, %s23, 0
        %s216 = scalar_lea.vmem %s2, %s215
        %p217 = pneg %p113
        %p218 = pneg %p110
        %p219 = pneg %p141
        %p220 = pneg %p138
        %s221 = sand.u32 %s128, 1
        %s222 = scalar_lea.sflag [#allocation4], %s221
        %s223 = sand.u32 %s128, 1
        %s224 = smul.addr %s223, 256
        %s225 = scalar_lea.vmem [#allocation3], %s224
        %s226 = smul.u32 32, %s22
        %p227 = scmp.lt.s32.totalorder %s226, 63
        %s228 = scalar_select %p227, %s226, 63
        %p229 = scmp.lt.s32.totalorder %s24, 0
        %s230 = scalar_select %p229, %s24, 0
        %s231 = sadd.s32 %s230, %s228
        %s232 = smul.addr %s231, 4
        %s233 = scalar_lea.vmem %s0, %s232
        %s234 = smul.u32 32, %s22
        %p235 = scmp.lt.s32.totalorder %s24, 0
        %s236 = scalar_select %p235, %s24, 0
        %p237 = scmp.lt.s32.totalorder %s23, 0
        %s238 = scalar_select %p237, %s23, 0
        %s239 = sadd.s32 %s238, %s236
        %s240 = smul.addr %s239, 2
        %s241 = scalar_lea.vmem %s1, %s240
        %p242 = scmp.lt.s32.totalorder %s23, 0
        %s243 = scalar_select %p242, %s23, 0
        %s244 = scalar_lea.vmem %s2, %s243
        %s245 = smul.u32 32, %s22
        %p247 = scmp.eq.s32.totalorder %s24, 0
        // Predicated region
        $region33: #{tpu_custom_call.1} parent=31 // pred_check
          %p248 = pneg %p247
        $region34: #{tpu_custom_call.1} parent=31 // pred_check_branch
          %250 = sbr.rel (%p248) target = $region36
        $region35: #{tpu_custom_call.1} parent=31 // pred_region
          %251 = vst [vmem:[#allocation2] sm:$0xff] 0.0
          %252 = vst [vmem:[#allocation2 + $0x8] sm:$0xff] 0.0
          %253 = vst [vmem:[#allocation2 + $0x10] sm:$0xff] 0.0
          %254 = vst [vmem:[#allocation2 + $0x18] sm:$0xff] 0.0
          %255 = vst [vmem:[#allocation2 + $0x20] sm:$0xff] 0.0
          %256 = vst [vmem:[#allocation2 + $0x28] sm:$0xff] 0.0
          %257 = vst [vmem:[#allocation2 + $0x30] sm:$0xff] 0.0
          %258 = vst [vmem:[#allocation2 + $0x38] sm:$0xff] 0.0
          %259 = vst [vmem:[#allocation2 + $0x40] sm:$0xff] 0.0
          %260 = vst [vmem:[#allocation2 + $0x48] sm:$0xff] 0.0
          %261 = vst [vmem:[#allocation2 + $0x50] sm:$0xff] 0.0
          %262 = vst [vmem:[#allocation2 + $0x58] sm:$0xff] 0.0
          %263 = vst [vmem:[#allocation2 + $0x60] sm:$0xff] 0.0
          %264 = vst [vmem:[#allocation2 + $0x68] sm:$0xff] 0.0
          %265 = vst [vmem:[#allocation2 + $0x70] sm:$0xff] 0.0
          %266 = vst [vmem:[#allocation2 + $0x78] sm:$0xff] 0.0
          %267 = vst [vmem:[#allocation2 + $0x80] sm:$0xff] 0.0
          %268 = vst [vmem:[#allocation2 + $0x88] sm:$0xff] 0.0
          %269 = vst [vmem:[#allocation2 + $0x90] sm:$0xff] 0.0
          %270 = vst [vmem:[#allocation2 + $0x98] sm:$0xff] 0.0
          %271 = vst [vmem:[#allocation2 + $0xa0] sm:$0xff] 0.0
          %272 = vst [vmem:[#allocation2 + $0xa8] sm:$0xff] 0.0
          %273 = vst [vmem:[#allocation2 + $0xb0] sm:$0xff] 0.0
          %274 = vst [vmem:[#allocation2 + $0xb8] sm:$0xff] 0.0
          %275 = vst [vmem:[#allocation2 + $0xc0] sm:$0xff] 0.0
          %276 = vst [vmem:[#allocation2 + $0xc8] sm:$0xff] 0.0
          %277 = vst [vmem:[#allocation2 + $0xd0] sm:$0xff] 0.0
          %278 = vst [vmem:[#allocation2 + $0xd8] sm:$0xff] 0.0
          %279 = vst [vmem:[#allocation2 + $0xe0] sm:$0xff] 0.0
          %280 = vst [vmem:[#allocation2 + $0xe8] sm:$0xff] 0.0
          %281 = vst [vmem:[#allocation2 + $0xf0] sm:$0xff] 0.0
          %282 = vst [vmem:[#allocation2 + $0xf8] sm:$0xff] 0.0
        $region36: #{tpu_custom_call.1} parent=31 // pred_fallthru
          _
        %v283 = vld [vmem:[#allocation2] sm:$0xff]
        %v284 = vld [vmem:[#allocation2 + $0x8] sm:$0xff]
        %v285 = vld [vmem:[#allocation2 + $0x10] sm:$0xff]
        %v286 = vld [vmem:[#allocation2 + $0x18] sm:$0xff]
        %v287 = vld [vmem:[#allocation2 + $0x20] sm:$0xff]
        %v288 = vld [vmem:[#allocation2 + $0x28] sm:$0xff]
        %v289 = vld [vmem:[#allocation2 + $0x30] sm:$0xff]
        %v290 = vld [vmem:[#allocation2 + $0x38] sm:$0xff]
        %v291 = vld [vmem:[#allocation2 + $0x40] sm:$0xff]
        %v292 = vld [vmem:[#allocation2 + $0x48] sm:$0xff]
        %v293 = vld [vmem:[#allocation2 + $0x50] sm:$0xff]
        %v294 = vld [vmem:[#allocation2 + $0x58] sm:$0xff]
        %v295 = vld [vmem:[#allocation2 + $0x60] sm:$0xff]
        %v296 = vld [vmem:[#allocation2 + $0x68] sm:$0xff]
        %v297 = vld [vmem:[#allocation2 + $0x70] sm:$0xff]
        %v298 = vld [vmem:[#allocation2 + $0x78] sm:$0xff]
        %v299 = vld [vmem:[#allocation2 + $0x80] sm:$0xff]
        %v300 = vld [vmem:[#allocation2 + $0x88] sm:$0xff]
        %v301 = vld [vmem:[#allocation2 + $0x90] sm:$0xff]
        %v302 = vld [vmem:[#allocation2 + $0x98] sm:$0xff]
        %v303 = vld [vmem:[#allocation2 + $0xa0] sm:$0xff]
        %v304 = vld [vmem:[#allocation2 + $0xa8] sm:$0xff]
        %v305 = vld [vmem:[#allocation2 + $0xb0] sm:$0xff]
        %v306 = vld [vmem:[#allocation2 + $0xb8] sm:$0xff]
        %v307 = vld [vmem:[#allocation2 + $0xc0] sm:$0xff]
        %v308 = vld [vmem:[#allocation2 + $0xc8] sm:$0xff]
        %v309 = vld [vmem:[#allocation2 + $0xd0] sm:$0xff]
        %v310 = vld [vmem:[#allocation2 + $0xd8] sm:$0xff]
        %v311 = vld [vmem:[#allocation2 + $0xe0] sm:$0xff]
        %v312 = vld [vmem:[#allocation2 + $0xe8] sm:$0xff]
        %v313 = vld [vmem:[#allocation2 + $0xf0] sm:$0xff]
        %v314 = vld [vmem:[#allocation2 + $0xf8] sm:$0xff]
        %v315 = vld [vmem:[%s233] sm:$0xf]
        %v316 = vld [vmem:[%s233 + $0x4] sm:$0xf]
        %v317 = vld [vmem:[%s233 + $0x8] sm:$0xf]
        %v318 = vld [vmem:[%s233 + $0xc] sm:$0xf]
        %v319 = vld [vmem:[%s233 + $0x10] sm:$0xf]
        %v320 = vld [vmem:[%s233 + $0x14] sm:$0xf]
        %v321 = vld [vmem:[%s233 + $0x18] sm:$0xf]
        %v322 = vld [vmem:[%s233 + $0x1c] sm:$0xf]
        %v323 = vld [vmem:[%s233 + $0x20] sm:$0xf]
        %v324 = vld [vmem:[%s233 + $0x24] sm:$0xf]
        %v325 = vld [vmem:[%s233 + $0x28] sm:$0xf]
        %v326 = vld [vmem:[%s233 + $0x2c] sm:$0xf]
        %v327 = vld [vmem:[%s233 + $0x30] sm:$0xf]
        %v328 = vld [vmem:[%s233 + $0x34] sm:$0xf]
        %v329 = vld [vmem:[%s233 + $0x38] sm:$0xf]
        %v330 = vld [vmem:[%s233 + $0x3c] sm:$0xf]
        %v331 = vld [vmem:[%s233 + $0x40] sm:$0xf]
        %v332 = vld [vmem:[%s233 + $0x44] sm:$0xf]
        %v333 = vld [vmem:[%s233 + $0x48] sm:$0xf]
        %v334 = vld [vmem:[%s233 + $0x4c] sm:$0xf]
        %v335 = vld [vmem:[%s233 + $0x50] sm:$0xf]
        %v336 = vld [vmem:[%s233 + $0x54] sm:$0xf]
        %v337 = vld [vmem:[%s233 + $0x58] sm:$0xf]
        %v338 = vld [vmem:[%s233 + $0x5c] sm:$0xf]
        %v339 = vld [vmem:[%s233 + $0x60] sm:$0xf]
        %v340 = vld [vmem:[%s233 + $0x64] sm:$0xf]
        %v341 = vld [vmem:[%s233 + $0x68] sm:$0xf]
        %v342 = vld [vmem:[%s233 + $0x6c] sm:$0xf]
        %v343 = vld [vmem:[%s233 + $0x70] sm:$0xf]
        %v344 = vld [vmem:[%s233 + $0x74] sm:$0xf]
        %v345 = vld [vmem:[%s233 + $0x78] sm:$0xf]
        %v346 = vld [vmem:[%s233 + $0x7c] sm:$0xf]
        %v347 = vld [vmem:[%s241] sm:$0x3]
        %v380 = vunpack.c.l.b16 %v315
        %v381 = vunpack.c.l.b16 %v316
        %v382 = vunpack.c.l.b16 %v317
        %v383 = vunpack.c.l.b16 %v318
        %v384 = vunpack.c.l.b16 %v319
        %v385 = vunpack.c.l.b16 %v320
        %v386 = vunpack.c.l.b16 %v321
        %v387 = vunpack.c.l.b16 %v322
        %v388 = vunpack.c.l.b16 %v323
        %v389 = vunpack.c.l.b16 %v324
        %v390 = vunpack.c.l.b16 %v325
        %v391 = vunpack.c.l.b16 %v326
        %v392 = vunpack.c.l.b16 %v327
        %v393 = vunpack.c.l.b16 %v328
        %v394 = vunpack.c.l.b16 %v329
        %v395 = vunpack.c.l.b16 %v330
        %v396 = vunpack.c.l.b16 %v331
        %v397 = vunpack.c.l.b16 %v332
        %v398 = vunpack.c.l.b16 %v333
        %v399 = vunpack.c.l.b16 %v334
        %v400 = vunpack.c.l.b16 %v335
        %v401 = vunpack.c.l.b16 %v336
        %v402 = vunpack.c.l.b16 %v337
        %v403 = vunpack.c.l.b16 %v338
        %v404 = vunpack.c.l.b16 %v339
        %v405 = vunpack.c.l.b16 %v340
        %v406 = vunpack.c.l.b16 %v341
        %v407 = vunpack.c.l.b16 %v342
        %v408 = vunpack.c.l.b16 %v343
        %v409 = vunpack.c.l.b16 %v344
        %v410 = vunpack.c.l.b16 %v345
        %v411 = vunpack.c.l.b16 %v346
        %v412 = vpack.c.b16 %v381, %v380
        %v413 = vpack.c.b16 %v383, %v382
        %v414 = vpack.c.b16 %v385, %v384
        %v415 = vpack.c.b16 %v387, %v386
        %v416 = vpack.c.b16 %v389, %v388
        %v417 = vpack.c.b16 %v391, %v390
        %v418 = vpack.c.b16 %v393, %v392
        %v419 = vpack.c.b16 %v395, %v394
        %v420 = vpack.c.b16 %v397, %v396
        %v421 = vpack.c.b16 %v399, %v398
        %v422 = vpack.c.b16 %v401, %v400
        %v423 = vpack.c.b16 %v403, %v402
        %v424 = vpack.c.b16 %v405, %v404
        %v425 = vpack.c.b16 %v407, %v406
        %v426 = vpack.c.b16 %v409, %v408
        %v427 = vpack.c.b16 %v411, %v410
        %vm428 = vcmask 23552
        %v430 = vsel %vm428, %v412, 0
        %v433 = vsel %vm428, %v413, 0
        %v436 = vsel %vm428, %v414, 0
        %v439 = vsel %vm428, %v415, 0
        %v442 = vsel %vm428, %v416, 0
        %v445 = vsel %vm428, %v417, 0
        %v448 = vsel %vm428, %v418, 0
        %v451 = vsel %vm428, %v419, 0
        %v454 = vsel %vm428, %v420, 0
        %v457 = vsel %vm428, %v421, 0
        %v460 = vsel %vm428, %v422, 0
        %v463 = vsel %vm428, %v423, 0
        %v466 = vsel %vm428, %v424, 0
        %v469 = vsel %vm428, %v425, 0
        %v472 = vsel %vm428, %v426, 0
        %v475 = vsel %vm428, %v427, 0
        %vm477 = vcmask 1040384
        %vm478 = vcmask 1041408
        %v479 = vsel %vm477, 4294967295, 65535
        %v480 = vsel %vm478, %v479, 0
        %v482 = vand.u32 %v347, %v480
        %484 = vmatprep.subr.bf16.mxu0 0
        %485 = vmatpush1.bf16.msra.mxu0 %v482
        %486 = vmatprep.subr.bf16.mxu0 0
        %487 = vmatpush1.bf16.msra.mxu0 0
        %488 = vmatprep.subr.bf16.mxu0 0
        %489 = vmatpush1.bf16.msra.mxu0 0
        %490 = vmatprep.subr.bf16.mxu0 0
        %491 = vmatpush1.bf16.msra.mxu0 0
        %492 = vmatprep.subr.bf16.mxu0 0
        %493 = vmatpush1.bf16.msra.mxu0 0
        %494 = vmatprep.subr.bf16.mxu0 0
        %495 = vmatpush1.bf16.msra.mxu0 0
        %496 = vmatprep.subr.bf16.mxu0 0
        %497 = vmatpush1.bf16.msra.mxu0 0
        %498 = vmatprep.subr.bf16.mxu0 0
        %499 = vmatpush1.bf16.msra.mxu0 0
        %500 = vmatprep.subr.bf16.mxu0 0
        %501 = vmatpush1.bf16.msra.mxu0 0
        %502 = vmatprep.subr.bf16.mxu0 0
        %503 = vmatpush1.bf16.msra.mxu0 0
        %504 = vmatprep.subr.bf16.mxu0 0
        %505 = vmatpush1.bf16.msra.mxu0 0
        %506 = vmatprep.subr.bf16.mxu0 0
        %507 = vmatpush1.bf16.msra.mxu0 0
        %508 = vmatprep.subr.bf16.mxu0 0
        %509 = vmatpush1.bf16.msra.mxu0 0
        %510 = vmatprep.subr.bf16.mxu0 0
        %511 = vmatpush1.bf16.msra.mxu0 0
        %512 = vmatprep.subr.bf16.mxu0 0
        %513 = vmatpush1.bf16.msra.mxu0 0
        %514 = vmatprep.subr.bf16.mxu0 0
        %515 = vmatpush1.bf16.msra.mxu0 0
        %516 = vmatprep.mubr.bf16.mxu0 0
        %517 = vmatmul.mubr.bf16.gmra.mrb[0].mxu0 %v430
        %v518 = vpop.f32.mrb[0].mxu0
        %v519 = vadd.f32 0.0, %v518
        %v520 = vpop.f32.mrb[0].mxu0
        %v521 = vpop.f32.mrb[0].mxu0
        %v522 = vadd.f32 0.0, %v521
        %v523 = vpop.f32.mrb[0].mxu0
        %524 = vmatprep.mubr.bf16.mxu0 0
        %525 = vmatmul.mubr.bf16.gmra.mrb[0].mxu0 %v433
        %v526 = vpop.f32.mrb[0].mxu0
        %v527 = vadd.f32 0.0, %v526
        %v528 = vpop.f32.mrb[0].mxu0
        %v529 = vpop.f32.mrb[0].mxu0
        %v530 = vadd.f32 0.0, %v529
        %v531 = vpop.f32.mrb[0].mxu0
        %532 = vmatprep.mubr.bf16.mxu0 0
        %533 = vmatmul.mubr.bf16.gmra.mrb[0].mxu0 %v436
        %v534 = vpop.f32.mrb[0].mxu0
        %v535 = vadd.f32 0.0, %v534
        %v536 = vpop.f32.mrb[0].mxu0
        %v537 = vpop.f32.mrb[0].mxu0
        %v538 = vadd.f32 0.0, %v537
        %v539 = vpop.f32.mrb[0].mxu0
        %540 = vmatprep.mubr.bf16.mxu0 0
        %541 = vmatmul.mubr.bf16.gmra.mrb[0].mxu0 %v439
        %v542 = vpop.f32.mrb[0].mxu0
        %v543 = vadd.f32 0.0, %v542
        %v544 = vpop.f32.mrb[0].mxu0
        %v545 = vpop.f32.mrb[0].mxu0
        %v546 = vadd.f32 0.0, %v545
        %v547 = vpop.f32.mrb[0].mxu0
        %548 = vmatprep.mubr.bf16.mxu0 0
        %549 = vmatmul.mubr.bf16.gmra.mrb[0].mxu0 %v442
        %v550 = vpop.f32.mrb[0].mxu0
        %v551 = vadd.f32 0.0, %v550
        %v552 = vpop.f32.mrb[0].mxu0
        %v553 = vpop.f32.mrb[0].mxu0
        %v554 = vadd.f32 0.0, %v553
        %v555 = vpop.f32.mrb[0].mxu0
        %556 = vmatprep.mubr.bf16.mxu0 0
        %557 = vmatmul.mubr.bf16.gmra.mrb[0].mxu0 %v445
        %v558 = vpop.f32.mrb[0].mxu0
        %v559 = vadd.f32 0.0, %v558
        %v560 = vpop.f32.mrb[0].mxu0
        %v561 = vpop.f32.mrb[0].mxu0
        %v562 = vadd.f32 0.0, %v561
        %v563 = vpop.f32.mrb[0].mxu0
        %564 = vmatprep.mubr.bf16.mxu0 0
        %565 = vmatmul.mubr.bf16.gmra.mrb[0].mxu0 %v448
        %v566 = vpop.f32.mrb[0].mxu0
        %v567 = vadd.f32 0.0, %v566
        %v568 = vpop.f32.mrb[0].mxu0
        %v569 = vpop.f32.mrb[0].mxu0
        %v570 = vadd.f32 0.0, %v569
        %v571 = vpop.f32.mrb[0].mxu0
        %572 = vmatprep.mubr.bf16.mxu0 0
        %573 = vmatmul.mubr.bf16.gmra.mrb[0].mxu0 %v451
        %v574 = vpop.f32.mrb[0].mxu0
        %v575 = vadd.f32 0.0, %v574
        %v576 = vpop.f32.mrb[0].mxu0
        %v577 = vpop.f32.mrb[0].mxu0
        %v578 = vadd.f32 0.0, %v577
        %v579 = vpop.f32.mrb[0].mxu0
        %580 = vmatprep.mubr.bf16.mxu0 0
        %581 = vmatmul.mubr.bf16.gmra.mrb[0].mxu0 %v454
        %v582 = vpop.f32.mrb[0].mxu0
        %v583 = vadd.f32 0.0, %v582
        %v584 = vpop.f32.mrb[0].mxu0
        %v585 = vpop.f32.mrb[0].mxu0
        %v586 = vadd.f32 0.0, %v585
        %v587 = vpop.f32.mrb[0].mxu0
        %588 = vmatprep.mubr.bf16.mxu0 0
        %589 = vmatmul.mubr.bf16.gmra.mrb[0].mxu0 %v457
        %v590 = vpop.f32.mrb[0].mxu0
        %v591 = vadd.f32 0.0, %v590
        %v592 = vpop.f32.mrb[0].mxu0
        %v593 = vpop.f32.mrb[0].mxu0
        %v594 = vadd.f32 0.0, %v593
        %v595 = vpop.f32.mrb[0].mxu0
        %596 = vmatprep.mubr.bf16.mxu0 0
        %597 = vmatmul.mubr.bf16.gmra.mrb[0].mxu0 %v460
        %v598 = vpop.f32.mrb[0].mxu0
        %v599 = vadd.f32 0.0, %v598
        %v600 = vpop.f32.mrb[0].mxu0
        %v601 = vpop.f32.mrb[0].mxu0
        %v602 = vadd.f32 0.0, %v601
        %v603 = vpop.f32.mrb[0].mxu0
        %604 = vmatprep.mubr.bf16.mxu0 0
        %605 = vmatmul.mubr.bf16.gmra.mrb[0].mxu0 %v463
        %v606 = vpop.f32.mrb[0].mxu0
        %v607 = vadd.f32 0.0, %v606
        %v608 = vpop.f32.mrb[0].mxu0
        %v609 = vpop.f32.mrb[0].mxu0
        %v610 = vadd.f32 0.0, %v609
        %v611 = vpop.f32.mrb[0].mxu0
        %612 = vmatprep.mubr.bf16.mxu0 0
        %613 = vmatmul.mubr.bf16.gmra.mrb[0].mxu0 %v466
        %v614 = vpop.f32.mrb[0].mxu0
        %v615 = vadd.f32 0.0, %v614
        %v616 = vpop.f32.mrb[0].mxu0
        %v617 = vpop.f32.mrb[0].mxu0
        %v618 = vadd.f32 0.0, %v617
        %v619 = vpop.f32.mrb[0].mxu0
        %620 = vmatprep.mubr.bf16.mxu0 0
        %621 = vmatmul.mubr.bf16.gmra.mrb[0].mxu0 %v469
        %v622 = vpop.f32.mrb[0].mxu0
        %v623 = vadd.f32 0.0, %v622
        %v624 = vpop.f32.mrb[0].mxu0
        %v625 = vpop.f32.mrb[0].mxu0
        %v626 = vadd.f32 0.0, %v625
        %v627 = vpop.f32.mrb[0].mxu0
        %628 = vmatprep.mubr.bf16.mxu0 0
        %629 = vmatmul.mubr.bf16.gmra.mrb[0].mxu0 %v472
        %v630 = vpop.f32.mrb[0].mxu0
        %v631 = vadd.f32 0.0, %v630
        %v632 = vpop.f32.mrb[0].mxu0
        %v633 = vpop.f32.mrb[0].mxu0
        %v634 = vadd.f32 0.0, %v633
        %v635 = vpop.f32.mrb[0].mxu0
        %636 = vmatprep.mubr.bf16.mxu0 0
        %637 = vmatmul.mubr.bf16.gmra.mrb[0].mxu0 %v475
        %v638 = vpop.f32.mrb[0].mxu0
        %v639 = vadd.f32 0.0, %v638
        %v640 = vpop.f32.mrb[0].mxu0
        %v641 = vpop.f32.mrb[0].mxu0
        %v642 = vadd.f32 0.0, %v641
        %v643 = vpop.f32.mrb[0].mxu0
        %644 = vdwg.mxu0
        %v645 = vadd.f32 %v283, %v519
        %v646 = vadd.f32 %v284, %v522
        %v647 = vadd.f32 %v285, %v527
        %v648 = vadd.f32 %v286, %v530
        %v649 = vadd.f32 %v287, %v535
        %v650 = vadd.f32 %v288, %v538
        %v651 = vadd.f32 %v289, %v543
        %v652 = vadd.f32 %v290, %v546
        %v653 = vadd.f32 %v291, %v551
        %v654 = vadd.f32 %v292, %v554
        %v655 = vadd.f32 %v293, %v559
        %v656 = vadd.f32 %v294, %v562
        %v657 = vadd.f32 %v295, %v567
        %v658 = vadd.f32 %v296, %v570
        %v659 = vadd.f32 %v297, %v575
        %v660 = vadd.f32 %v298, %v578
        %v661 = vadd.f32 %v299, %v583
        %v662 = vadd.f32 %v300, %v586
        %v663 = vadd.f32 %v301, %v591
        %v664 = vadd.f32 %v302, %v594
        %v665 = vadd.f32 %v303, %v599
        %v666 = vadd.f32 %v304, %v602
        %v667 = vadd.f32 %v305, %v607
        %v668 = vadd.f32 %v306, %v610
        %v669 = vadd.f32 %v307, %v615
        %v670 = vadd.f32 %v308, %v618
        %v671 = vadd.f32 %v309, %v623
        %v672 = vadd.f32 %v310, %v626
        %v673 = vadd.f32 %v311, %v631
        %v674 = vadd.f32 %v312, %v634
        %v675 = vadd.f32 %v313, %v639
        %v676 = vadd.f32 %v314, %v642
        %677 = vst [vmem:[#allocation2] sm:$0xff] %v645
        %678 = vst [vmem:[#allocation2 + $0x8] sm:$0xff] %v646
        %679 = vst [vmem:[#allocation2 + $0x10] sm:$0xff] %v647
        %680 = vst [vmem:[#allocation2 + $0x18] sm:$0xff] %v648
        %681 = vst [vmem:[#allocation2 + $0x20] sm:$0xff] %v649
        %682 = vst [vmem:[#allocation2 + $0x28] sm:$0xff] %v650
        %683 = vst [vmem:[#allocation2 + $0x30] sm:$0xff] %v651
        %684 = vst [vmem:[#allocation2 + $0x38] sm:$0xff] %v652
        %685 = vst [vmem:[#allocation2 + $0x40] sm:$0xff] %v653
        %686 = vst [vmem:[#allocation2 + $0x48] sm:$0xff] %v654
        %687 = vst [vmem:[#allocation2 + $0x50] sm:$0xff] %v655
        %688 = vst [vmem:[#allocation2 + $0x58] sm:$0xff] %v656
        %689 = vst [vmem:[#allocation2 + $0x60] sm:$0xff] %v657
        %690 = vst [vmem:[#allocation2 + $0x68] sm:$0xff] %v658
        %691 = vst [vmem:[#allocation2 + $0x70] sm:$0xff] %v659
        %692 = vst [vmem:[#allocation2 + $0x78] sm:$0xff] %v660
        %693 = vst [vmem:[#allocation2 + $0x80] sm:$0xff] %v661
        %694 = vst [vmem:[#allocation2 + $0x88] sm:$0xff] %v662
        %695 = vst [vmem:[#allocation2 + $0x90] sm:$0xff] %v663
        %696 = vst [vmem:[#allocation2 + $0x98] sm:$0xff] %v664
        %697 = vst [vmem:[#allocation2 + $0xa0] sm:$0xff] %v665
        %698 = vst [vmem:[#allocation2 + $0xa8] sm:$0xff] %v666
        %699 = vst [vmem:[#allocation2 + $0xb0] sm:$0xff] %v667
        %700 = vst [vmem:[#allocation2 + $0xb8] sm:$0xff] %v668
        %701 = vst [vmem:[#allocation2 + $0xc0] sm:$0xff] %v669
        %702 = vst [vmem:[#allocation2 + $0xc8] sm:$0xff] %v670
        %703 = vst [vmem:[#allocation2 + $0xd0] sm:$0xff] %v671
        %704 = vst [vmem:[#allocation2 + $0xd8] sm:$0xff] %v672
        %705 = vst [vmem:[#allocation2 + $0xe0] sm:$0xff] %v673
        %706 = vst [vmem:[#allocation2 + $0xe8] sm:$0xff] %v674
        %707 = vst [vmem:[#allocation2 + $0xf0] sm:$0xff] %v675
        %708 = vst [vmem:[#allocation2 + $0xf8] sm:$0xff] %v676
        // Predicated region
        $region37: #{tpu_custom_call.1} parent=31 // pred_check
          %p709 = pneg %p247
        $region38: #{tpu_custom_call.1} parent=31 // pred_check_branch
          %711 = sbr.rel (%p709) target = $region40
        $region39: #{tpu_custom_call.1} parent=31 // pred_region
          %v712 = vld [vmem:[#allocation2] sm:$0xff]
          %v713 = vld [vmem:[#allocation2 + $0x8] sm:$0xff]
          %v714 = vld [vmem:[#allocation2 + $0x10] sm:$0xff]
          %v715 = vld [vmem:[#allocation2 + $0x18] sm:$0xff]
          %v716 = vld [vmem:[#allocation2 + $0x20] sm:$0xff]
          %v717 = vld [vmem:[#allocation2 + $0x28] sm:$0xff]
          %v718 = vld [vmem:[#allocation2 + $0x30] sm:$0xff]
          %v719 = vld [vmem:[#allocation2 + $0x38] sm:$0xff]
          %v720 = vld [vmem:[#allocation2 + $0x40] sm:$0xff]
          %v721 = vld [vmem:[#allocation2 + $0x48] sm:$0xff]
          %v722 = vld [vmem:[#allocation2 + $0x50] sm:$0xff]
          %v723 = vld [vmem:[#allocation2 + $0x58] sm:$0xff]
          %v724 = vld [vmem:[#allocation2 + $0x60] sm:$0xff]
          %v725 = vld [vmem:[#allocation2 + $0x68] sm:$0xff]
          %v726 = vld [vmem:[#allocation2 + $0x70] sm:$0xff]
          %v727 = vld [vmem:[#allocation2 + $0x78] sm:$0xff]
          %v728 = vld [vmem:[#allocation2 + $0x80] sm:$0xff]
          %v729 = vld [vmem:[#allocation2 + $0x88] sm:$0xff]
          %v730 = vld [vmem:[#allocation2 + $0x90] sm:$0xff]
          %v731 = vld [vmem:[#allocation2 + $0x98] sm:$0xff]
          %v732 = vld [vmem:[#allocation2 + $0xa0] sm:$0xff]
          %v733 = vld [vmem:[#allocation2 + $0xa8] sm:$0xff]
          %v734 = vld [vmem:[#allocation2 + $0xb0] sm:$0xff]
          %v735 = vld [vmem:[#allocation2 + $0xb8] sm:$0xff]
          %v736 = vld [vmem:[#allocation2 + $0xc0] sm:$0xff]
          %v737 = vld [vmem:[#allocation2 + $0xc8] sm:$0xff]
          %v738 = vld [vmem:[#allocation2 + $0xd0] sm:$0xff]
          %v739 = vld [vmem:[#allocation2 + $0xd8] sm:$0xff]
          %v740 = vld [vmem:[#allocation2 + $0xe0] sm:$0xff]
          %v741 = vld [vmem:[#allocation2 + $0xe8] sm:$0xff]
          %v742 = vld [vmem:[#allocation2 + $0xf0] sm:$0xff]
          %v743 = vld [vmem:[#allocation2 + $0xf8] sm:$0xff]
          %v744 = vld [vmem:[%s244] sm:$0x1]
          %v746 = vlaneseq
          %v747 = vshrl.u32 %v746, 7
          %v748 = vsub.s32 0, %v747
          %v749 = vrot.slane %v744, %v748
          %v751 = vadd.f32 %v712, %v749
          %v752 = vadd.f32 %v713, %v749
          %v753 = vadd.f32 %v714, %v749
          %v754 = vadd.f32 %v715, %v749
          %v755 = vadd.f32 %v716, %v749
          %v756 = vadd.f32 %v717, %v749
          %v757 = vadd.f32 %v718, %v749
          %v758 = vadd.f32 %v719, %v749
          %v759 = vadd.f32 %v720, %v749
          %v760 = vadd.f32 %v721, %v749
          %v761 = vadd.f32 %v722, %v749
          %v762 = vadd.f32 %v723, %v749
          %v763 = vadd.f32 %v724, %v749
          %v764 = vadd.f32 %v725, %v749
          %v765 = vadd.f32 %v726, %v749
          %v766 = vadd.f32 %v727, %v749
          %v767 = vadd.f32 %v728, %v749
          %v768 = vadd.f32 %v729, %v749
          %v769 = vadd.f32 %v730, %v749
          %v770 = vadd.f32 %v731, %v749
          %v771 = vadd.f32 %v732, %v749
          %v772 = vadd.f32 %v733, %v749
          %v773 = vadd.f32 %v734, %v749
          %v774 = vadd.f32 %v735, %v749
          %v775 = vadd.f32 %v736, %v749
          %v776 = vadd.f32 %v737, %v749
          %v777 = vadd.f32 %v738, %v749
          %v778 = vadd.f32 %v739, %v749
          %v779 = vadd.f32 %v740, %v749
          %v780 = vadd.f32 %v741, %v749
          %v781 = vadd.f32 %v742, %v749
          %v782 = vadd.f32 %v743, %v749
          %vm783 = vcmp.ge.f32.partialorder %v751, 0.0
          %vm784 = vcmp.ge.f32.partialorder %v752, 0.0
          %vm785 = vcmp.ge.f32.partialorder %v753, 0.0
          %vm786 = vcmp.ge.f32.partialorder %v754, 0.0
          %vm787 = vcmp.ge.f32.partialorder %v755, 0.0
          %vm788 = vcmp.ge.f32.partialorder %v756, 0.0
          %vm789 = vcmp.ge.f32.partialorder %v757, 0.0
          %vm790 = vcmp.ge.f32.partialorder %v758, 0.0
          %vm791 = vcmp.ge.f32.partialorder %v759, 0.0
          %vm792 = vcmp.ge.f32.partialorder %v760, 0.0
          %vm793 = vcmp.ge.f32.partialorder %v761, 0.0
          %vm794 = vcmp.ge.f32.partialorder %v762, 0.0
          %vm795 = vcmp.ge.f32.partialorder %v763, 0.0
          %vm796 = vcmp.ge.f32.partialorder %v764, 0.0
          %vm797 = vcmp.ge.f32.partialorder %v765, 0.0
          %vm798 = vcmp.ge.f32.partialorder %v766, 0.0
          %vm799 = vcmp.ge.f32.partialorder %v767, 0.0
          %vm800 = vcmp.ge.f32.partialorder %v768, 0.0
          %vm801 = vcmp.ge.f32.partialorder %v769, 0.0
          %vm802 = vcmp.ge.f32.partialorder %v770, 0.0
          %vm803 = vcmp.ge.f32.partialorder %v771, 0.0
          %vm804 = vcmp.ge.f32.partialorder %v772, 0.0
          %vm805 = vcmp.ge.f32.partialorder %v773, 0.0
          %vm806 = vcmp.ge.f32.partialorder %v774, 0.0
          %vm807 = vcmp.ge.f32.partialorder %v775, 0.0
          %vm808 = vcmp.ge.f32.partialorder %v776, 0.0
          %vm809 = vcmp.ge.f32.partialorder %v777, 0.0
          %vm810 = vcmp.ge.f32.partialorder %v778, 0.0
          %vm811 = vcmp.ge.f32.partialorder %v779, 0.0
          %vm812 = vcmp.ge.f32.partialorder %v780, 0.0
          %vm813 = vcmp.ge.f32.partialorder %v781, 0.0
          %vm814 = vcmp.ge.f32.partialorder %v782, 0.0
          %v815 = vmul.f32 %v751, 0.2
          %v816 = vmul.f32 %v752, 0.2
          %v817 = vmul.f32 %v753, 0.2
          %v818 = vmul.f32 %v754, 0.2
          %v819 = vmul.f32 %v755, 0.2
          %v820 = vmul.f32 %v756, 0.2
          %v821 = vmul.f32 %v757, 0.2
          %v822 = vmul.f32 %v758, 0.2
          %v823 = vmul.f32 %v759, 0.2
          %v824 = vmul.f32 %v760, 0.2
          %v825 = vmul.f32 %v761, 0.2
          %v826 = vmul.f32 %v762, 0.2
          %v827 = vmul.f32 %v763, 0.2
          %v828 = vmul.f32 %v764, 0.2
          %v829 = vmul.f32 %v765, 0.2
          %v830 = vmul.f32 %v766, 0.2
          %v831 = vmul.f32 %v767, 0.2
          %v832 = vmul.f32 %v768, 0.2
          %v833 = vmul.f32 %v769, 0.2
          %v834 = vmul.f32 %v770, 0.2
          %v835 = vmul.f32 %v771, 0.2
          %v836 = vmul.f32 %v772, 0.2
          %v837 = vmul.f32 %v773, 0.2
          %v838 = vmul.f32 %v774, 0.2
          %v839 = vmul.f32 %v775, 0.2
          %v840 = vmul.f32 %v776, 0.2
          %v841 = vmul.f32 %v777, 0.2
          %v842 = vmul.f32 %v778, 0.2
          %v843 = vmul.f32 %v779, 0.2
          %v844 = vmul.f32 %v780, 0.2
          %v845 = vmul.f32 %v781, 0.2
          %v846 = vmul.f32 %v782, 0.2
          %v847 = vsel %vm783, %v751, %v815
          %v848 = vsel %vm784, %v752, %v816
          %v849 = vsel %vm785, %v753, %v817
          %v850 = vsel %vm786, %v754, %v818
          %v851 = vsel %vm787, %v755, %v819
          %v852 = vsel %vm788, %v756, %v820
          %v853 = vsel %vm789, %v757, %v821
          %v854 = vsel %vm790, %v758, %v822
          %v855 = vsel %vm791, %v759, %v823
          %v856 = vsel %vm792, %v760, %v824
          %v857 = vsel %vm793, %v761, %v825
          %v858 = vsel %vm794, %v762, %v826
          %v859 = vsel %vm795, %v763, %v827
          %v860 = vsel %vm796, %v764, %v828
          %v861 = vsel %vm797, %v765, %v829
          %v862 = vsel %vm798, %v766, %v830
          %v863 = vsel %vm799, %v767, %v831
          %v864 = vsel %vm800, %v768, %v832
          %v865 = vsel %vm801, %v769, %v833
          %v866 = vsel %vm802, %v770, %v834
          %v867 = vsel %vm803, %v771, %v835
          %v868 = vsel %vm804, %v772, %v836
          %v869 = vsel %vm805, %v773, %v837
          %v870 = vsel %vm806, %v774, %v838
          %v871 = vsel %vm807, %v775, %v839
          %v872 = vsel %vm808, %v776, %v840
          %v873 = vsel %vm809, %v777, %v841
          %v874 = vsel %vm810, %v778, %v842
          %v875 = vsel %vm811, %v779, %v843
          %v876 = vsel %vm812, %v780, %v844
          %v877 = vsel %vm813, %v781, %v845
          %v878 = vsel %vm814, %v782, %v846
          %v879 = vmul.f32 %v847, 1.4142135
          %v880 = vmul.f32 %v848, 1.4142135
          %v881 = vmul.f32 %v849, 1.4142135
          %v882 = vmul.f32 %v850, 1.4142135
          %v883 = vmul.f32 %v851, 1.4142135
          %v884 = vmul.f32 %v852, 1.4142135
          %v885 = vmul.f32 %v853, 1.4142135
          %v886 = vmul.f32 %v854, 1.4142135
          %v887 = vmul.f32 %v855, 1.4142135
          %v888 = vmul.f32 %v856, 1.4142135
          %v889 = vmul.f32 %v857, 1.4142135
          %v890 = vmul.f32 %v858, 1.4142135
          %v891 = vmul.f32 %v859, 1.4142135
          %v892 = vmul.f32 %v860, 1.4142135
          %v893 = vmul.f32 %v861, 1.4142135
          %v894 = vmul.f32 %v862, 1.4142135
          %v895 = vmul.f32 %v863, 1.4142135
          %v896 = vmul.f32 %v864, 1.4142135
          %v897 = vmul.f32 %v865, 1.4142135
          %v898 = vmul.f32 %v866, 1.4142135
          %v899 = vmul.f32 %v867, 1.4142135
          %v900 = vmul.f32 %v868, 1.4142135
          %v901 = vmul.f32 %v869, 1.4142135
          %v902 = vmul.f32 %v870, 1.4142135
          %v903 = vmul.f32 %v871, 1.4142135
          %v904 = vmul.f32 %v872, 1.4142135
          %v905 = vmul.f32 %v873, 1.4142135
          %v906 = vmul.f32 %v874, 1.4142135
          %v907 = vmul.f32 %v875, 1.4142135
          %v908 = vmul.f32 %v876, 1.4142135
          %v909 = vmul.f32 %v877, 1.4142135
          %v910 = vmul.f32 %v878, 1.4142135
          %911 = vst [vmem:[%s225] sm:$0xff] %v879
          %912 = vst [vmem:[%s225 + $0x8] sm:$0xff] %v880
          %913 = vst [vmem:[%s225 + $0x10] sm:$0xff] %v881
          %914 = vst [vmem:[%s225 + $0x18] sm:$0xff] %v882
          %915 = vst [vmem:[%s225 + $0x20] sm:$0xff] %v883
          %916 = vst [vmem:[%s225 + $0x28] sm:$0xff] %v884
          %917 = vst [vmem:[%s225 + $0x30] sm:$0xff] %v885
          %918 = vst [vmem:[%s225 + $0x38] sm:$0xff] %v886
          %919 = vst [vmem:[%s225 + $0x40] sm:$0xff] %v887
          %920 = vst [vmem:[%s225 + $0x48] sm:$0xff] %v888
          %921 = vst [vmem:[%s225 + $0x50] sm:$0xff] %v889
          %922 = vst [vmem:[%s225 + $0x58] sm:$0xff] %v890
          %923 = vst [vmem:[%s225 + $0x60] sm:$0xff] %v891
          %924 = vst [vmem:[%s225 + $0x68] sm:$0xff] %v892
          %925 = vst [vmem:[%s225 + $0x70] sm:$0xff] %v893
          %926 = vst [vmem:[%s225 + $0x78] sm:$0xff] %v894
          %927 = vst [vmem:[%s225 + $0x80] sm:$0xff] %v895
          %928 = vst [vmem:[%s225 + $0x88] sm:$0xff] %v896
          %929 = vst [vmem:[%s225 + $0x90] sm:$0xff] %v897
          %930 = vst [vmem:[%s225 + $0x98] sm:$0xff] %v898
          %931 = vst [vmem:[%s225 + $0xa0] sm:$0xff] %v899
          %932 = vst [vmem:[%s225 + $0xa8] sm:$0xff] %v900
          %933 = vst [vmem:[%s225 + $0xb0] sm:$0xff] %v901
          %934 = vst [vmem:[%s225 + $0xb8] sm:$0xff] %v902
          %935 = vst [vmem:[%s225 + $0xc0] sm:$0xff] %v903
          %936 = vst [vmem:[%s225 + $0xc8] sm:$0xff] %v904
          %937 = vst [vmem:[%s225 + $0xd0] sm:$0xff] %v905
          %938 = vst [vmem:[%s225 + $0xd8] sm:$0xff] %v906
          %939 = vst [vmem:[%s225 + $0xe0] sm:$0xff] %v907
          %940 = vst [vmem:[%s225 + $0xe8] sm:$0xff] %v908
          %941 = vst [vmem:[%s225 + $0xf0] sm:$0xff] %v909
          %942 = vst [vmem:[%s225 + $0xf8] sm:$0xff] %v910
        $region40: #{tpu_custom_call.1} parent=31 // pred_fallthru
          _
        %s943 = sand.u32 %s128, 1
        %s944 = scalar_lea.sflag [#allocation4], %s943
        %s945 = sand.u32 %s128, 1
        %s946 = smul.addr %s945, 256
        %s947 = scalar_lea.vmem [#allocation3], %s946
        // Predicated region
        $region41: #{tpu_custom_call.1} parent=31 // pred_check
          %p948 = pneg %p138
        $region42: #{tpu_custom_call.1} parent=31 // pred_check_branch
          %950 = sbr.rel (%p948) target = $region44
        $region43: #{tpu_custom_call.1} parent=31 // pred_region
          %s951 = smul.u32 32, %s22
          %s953 = ssub.s32 4096, 4096
          %954 = vsyncadd %s944, %s953
          %s955 = sadd.s32 %s23, %s951
          %s956 = smul.addr %s955, 128
          %s957 = scalar_lea.hbm %s3, %s956
          %s958 = sshll.u32 %s947, 4
          %s959 = int_to_ptr.vmem [resolvable:$true] %s958
          %964 = dma.vmem_to_hbm [thread:$0]  %s959, 4096, %s957, %s944, 128, 128, 8
        $region44: #{tpu_custom_call.1} parent=31 // pred_fallthru
          _
      $region32: #{tpu_custom_call.1} parent=5 // pred_fallthru
        _
      %p965 = scmp.le.s32.totalorder 2, %s12
      // Predicated region
      $region45: #{tpu_custom_call.1} parent=5 // pred_check
        %p966 = pneg %p965
      $region46: #{tpu_custom_call.1} parent=5 // pred_check_branch
        %968 = sbr.rel (%p966) target = $region48
      $region47: #{tpu_custom_call.1} parent=5 // pred_region
        %s969 = ssub.s32 %s12, 2
        // Predicated region
        $region49: #{tpu_custom_call.1} parent=47 // pred_check
          %p970 = pneg %p144
        $region50: #{tpu_custom_call.1} parent=47 // pred_check_branch
          %972 = sbr.rel (%p970) target = $region52
        $region51: #{tpu_custom_call.1} parent=47 // pred_region
          %s973 = sand.u32 %s129, 1
          %s974 = scalar_lea.sflag [#allocation4], %s973
          %s975 = sand.u32 %s129, 1
          %s976 = smul.addr %s975, 256
          %s977 = scalar_lea.vmem [#allocation3], %s976
          %978 = dma.done %s974, 4096
        $region52: #{tpu_custom_call.1} parent=47 // pred_fallthru
          _
      $region48: #{tpu_custom_call.1} parent=5 // pred_fallthru
        _
    $region6: #{tpu_custom_call.1} parent=1 // loop_footer
      %s16 = sadd.s32 1, %s12
    $region7: #{tpu_custom_call.1} parent=1 // loop_footer_branch
      %11 = sbr.rel target = $region3
    $region8: #{tpu_custom_call.1} parent=1 // loop_exit
      _
    %979 = vsyncpa [#allocation4], 1
    %s980 = scalar_lea.sflag [#allocation4], 1
    %981 = vsyncpa %s980, 1

</llo_original>
